<compile_context>
chip_gen: v7x
topology: tpu7x:2x2x1
jax: 0.10.0
libtpu: 0.0.40
codegen_flags: <defaults>
</compile_context>

<pallas_src>
import math

import jax
import jax.numpy as jnp
from jax.experimental import pallas as pl
from jax.experimental.pallas import tpu as pltpu


def _identity_kernel(x_ref, o_ref):
    # Whole VMEM tile in, whole VMEM tile out.
    o_ref[...] = x_ref[...]


def identity_encoder(x: jax.Array, *, target_block_bytes: int = 4 << 20) -> jax.Array:
    """Pallas implementation of IdentityEncoder.forward (returns x unchanged).

    Fast path: wrap in `jax.jit(..., donate_argnums=0)`; the kernel's output
    aliases the donated input buffer via input_output_aliases.
    """
    orig_shape = x.shape
    if x.size == 0:
        return x

    itemsize = x.dtype.itemsize
    total = x.size
    # Native sublane packing multiple: 8 for 32-bit, 16 for 16-bit, 32 for 8-bit.
    sub = 8 * max(1, 4 // itemsize)

    if total % 128 == 0:
        # Lane-dense 2D view: last dim = 128 -> full-lane, unmasked vector
        # stores; each block maps to one contiguous HBM range.
        lanes = 128
        rows = total // lanes
        row_bytes = lanes * itemsize
        block_rows = min(rows, max(1, target_block_bytes // row_bytes))
        if block_rows < rows:
            block_rows = min(rows, max(sub, (block_rows // sub) * sub))
        grid_n = pl.cdiv(rows, block_rows)
        # Keep at least 2 blocks when legal so both v7x TensorCores get work.
        if grid_n == 1 and rows >= 2 * sub:
            block_rows = pl.cdiv(pl.cdiv(rows, 2), sub) * sub
            grid_n = pl.cdiv(rows, block_rows)
        work_shape = (rows, lanes)
        block_shape = (block_rows, lanes)
        index_map = lambda i: (i, 0)
    else:
        # Fallback for awkward sizes: tile over the leading dim; the last two
        # block dims equal the full array extents (always a legal TPU block).
        if x.ndim >= 2:
            lead = orig_shape[0]
            mid = math.prod(orig_shape[1:-1])
            last = orig_shape[-1]
        else:
            lead, mid, last = 1, 1, total
        slice_bytes = mid * last * itemsize
        block_lead = min(lead, max(1, target_block_bytes // slice_bytes))
        grid_n = pl.cdiv(lead, block_lead)
        if grid_n == 1 and lead >= 2:
            block_lead = pl.cdiv(lead, 2)
            grid_n = pl.cdiv(lead, block_lead)
        # TODO(synk): if a single leading slice ever exceeds VMEM, sub-tile the
        # trailing dims as well.
        work_shape = (lead, mid, last)
        block_shape = (block_lead, mid, last)
        index_map = lambda i: (i, 0, 0)

    # Reshape of a contiguous array is metadata-only in XLA (no extra HBM pass).
    x_work = x.reshape(work_shape)

    out = pl.pallas_call(
        _identity_kernel,
        out_shape=jax.ShapeDtypeStruct(work_shape, x.dtype),
        grid_spec=pltpu.PrefetchScalarGridSpec(
            num_scalar_prefetch=0,
            grid=(grid_n,),
            in_specs=[pl.BlockSpec(block_shape, index_map)],
            out_specs=pl.BlockSpec(block_shape, index_map),
        ),
        compiler_params=pltpu.CompilerParams(
            dimension_semantics=("parallel",),
            vmem_limit_bytes=32 * 1024 * 1024,
        ),
        cost_estimate=pl.CostEstimate(
            flops=0, transcendentals=0, bytes_accessed=2 * total * itemsize
        ),
        input_output_aliases={0: 0},
    )(x_work)

    return out.reshape(orig_shape)


if __name__ == "__main__":
    key = jax.random.PRNGKey(0)
    shape = (2, 4, 16, 16)  # NCHW, consistent with a conv-style encoder input
    x = jax.random.normal(key, shape, dtype=jnp.float32)
    # Same key/shape => bit-identical reference values, so we can donate x's
    # buffer to the kernel (letting the aliased output reuse it) and still
    # verify bit-exactness afterwards.
    expected = jax.random.normal(key, shape, dtype=jnp.float32)

    run = jax.jit(identity_encoder, donate_argnums=(0,))
    y = jax.block_until_ready(run(x))

    assert y.shape == shape and y.dtype == jnp.float32
    assert bool(jnp.all(y == expected))
    print("KERNEL_OK")
</pallas_src>

<mosaic_0001>
module attributes {stable_mosaic.version = 11 : i64} {
  func.func @_identity_kernel(%arg0: i32, %arg1: memref<8x128xf32, #tpu.memory_space<vmem>>, %arg2: memref<8x128xf32, #tpu.memory_space<vmem>>) attributes {dimension_semantics = [#tpu.dimension_semantics<parallel>], iteration_bounds = array<i64: 2>, scalar_prefetch = 0 : i64, scratch_operands = 0 : i64, tpu.core_type = #tpu.core_type<tc>, window_params = [{transform_indices = @transform_0, window_bounds = array<i64: 8, 128>}, {transform_indices = @transform_1, window_bounds = array<i64: 8, 128>}]} {
    %c0 = arith.constant 0 : index
    %c0_0 = arith.constant 0 : index
    %0 = vector.load %arg1[%c0, %c0_0] : memref<8x128xf32, #tpu.memory_space<vmem>>, vector<8x128xf32>
    %c0_1 = arith.constant 0 : index
    %c0_2 = arith.constant 0 : index
    %1 = vector.load %arg2[%c0_1, %c0_2] : memref<8x128xf32, #tpu.memory_space<vmem>>, vector<8x128xf32>
    tpu.vector_store %arg2[%c0_1, %c0_2], %0 {strides = array<i32>} : memref<8x128xf32, #tpu.memory_space<vmem>>, vector<8x128xf32>,
    return
  }
  func.func @transform_0(%arg0: i32) -> (i32, i32) {
    %c0_i32 = arith.constant 0 : i32
    %c0_i32_0 = arith.constant 0 : i32
    return %arg0, %c0_i32 : i32, i32
  }
  func.func @transform_1(%arg0: i32) -> (i32, i32) {
    %c0_i32 = arith.constant 0 : i32
    %c0_i32_0 = arith.constant 0 : i32
    return %arg0, %c0_i32 : i32, i32
  }
}

</mosaic_0001>

<llo_original>
// kernel: identity_encoder.1
$region0: #{identity_encoder.1}
  #allocation0 [shape = 'u32[]', space=smem, size = 0x4, offset = 0x4, fixed_abs, tag = 'smem constant byte address 0x4 - core index']
  #allocation1 [shape = 'u32[144,128]{1,0:T(1,128)}', space=vmem, size = 0x12000, scoped, tag = 'internal scratch']
  %s0 = inlined_call_operand.vmem [shape: f32[16,128], index: 0, kind: input, shape index: {}, may-alias: {0,1}]
  %s1 = inlined_call_operand.vmem [shape: f32[16,128], index: 1, kind: output, shape index: {}, may-alias: {0,1}]
  %s2 = sld [smem:[#allocation0]]
  $region37: #{identity_encoder.1} parent=0
    _
  %s4 = ssub.s32 1, %s2
  %s5 = scalar_select 0, %s4, %s2
  loop: start=0, step=1, limit=4
  $region2: #{identity_encoder.1} parent=0 // loop_pre_header
    _
  $region3: #{identity_encoder.1} parent=0 // loop_header
    %s7 = sphi 0, %s11
    %p8 = scmp.ge.s32.totalorder %s7, 4
    %s17 = sphi 0, %s19
    %s20 = sphi 0, %s17
    %s21 = sphi 0, %s20
    %s37 = sphi 0, %s21
    %s43 = sphi 0, %s45
    %s46 = sphi 0, %s43
    %s47 = sphi 0, %s46
    %s63 = sphi 0, %s47
  $region4: #{identity_encoder.1} parent=0 // loop_header_branch
    %10 = sbr.rel (%p8) target = $region8
  $region5: #{identity_encoder.1} parent=0 // loop_body
    %s12 = ssub.s32 %s7, 1
    %s13 = ssub.s32 %s7, 2
    %s14 = sadd.s32 %s7, 1
    %s15 = ssub.s32 %s7, %s14
    %p16 = scmp.eq.s32.totalorder %s15, 0
    %s18 = sadd.s32 %s17, 1
    %s19 = scalar_select %p16, %s17, %s18
    %p22 = pneg %p16
    %p23 = scmp.eq.s32.totalorder %s7, 1
    %p24 = por %p22, %p23
    %p25 = scmp.ne.s32.totalorder %s17, %s20
    %p26 = scmp.eq.s32.totalorder %s7, 0
    %p27 = por %p25, %p26
    %p28 = scmp.ne.s32.totalorder %s17, %s20
    %p29 = scmp.eq.s32.totalorder %s12, 1
    %p30 = por %p28, %p29
    %p31 = scmp.ne.s32.totalorder %s20, %s21
    %p32 = scmp.eq.s32.totalorder %s12, 0
    %p33 = por %p31, %p32
    %p34 = scmp.ne.s32.totalorder %s20, %s21
    %p35 = scmp.eq.s32.totalorder %s13, 1
    %p36 = por %p34, %p35
    %p38 = scmp.ne.s32.totalorder %s21, %s37
    %p39 = scmp.eq.s32.totalorder %s13, 0
    %p40 = por %p38, %p39
    %s41 = ssub.s32 %s7, %s14
    %p42 = scmp.eq.s32.totalorder %s41, 0
    %s44 = sadd.s32 %s43, 1
    %s45 = scalar_select %p42, %s43, %s44
    %p48 = pneg %p42
    %p49 = scmp.eq.s32.totalorder %s7, 1
    %p50 = por %p48, %p49
    %p51 = scmp.ne.s32.totalorder %s43, %s46
    %p52 = scmp.eq.s32.totalorder %s7, 0
    %p53 = por %p51, %p52
    %p54 = scmp.ne.s32.totalorder %s43, %s46
    %p55 = scmp.eq.s32.totalorder %s12, 1
    %p56 = por %p54, %p55
    %p57 = scmp.ne.s32.totalorder %s46, %s47
    %p58 = scmp.eq.s32.totalorder %s12, 0
    %p59 = por %p57, %p58
    %p60 = scmp.ne.s32.totalorder %s46, %s47
    %p61 = scmp.eq.s32.totalorder %s13, 1
    %p62 = por %p60, %p61
    %p64 = scmp.ne.s32.totalorder %s47, %s63
    %p65 = scmp.eq.s32.totalorder %s13, 0
    %p66 = por %p64, %p65
    %p67 = scmp.le.s32.totalorder 1, %s7
    %p68 = scmp.lt.s32.totalorder %s7, 3
    %p69 = pnand %p67, %p68
    %p70 = pneg %p69
    // Predicated region
    $region9: #{identity_encoder.1} parent=5 // pred_check
      _
    $region10: #{identity_encoder.1} parent=5 // pred_check_branch
      %72 = sbr.rel (%p69) target = $region12
    $region11: #{identity_encoder.1} parent=5 // pred_region
      %s73 = ssub.s32 %s7, 1
    $region12: #{identity_encoder.1} parent=5 // pred_fallthru
      _
    %p74 = scmp.lt.s32.totalorder %s7, 2
    // Predicated region
    $region13: #{identity_encoder.1} parent=5 // pred_check
      %p75 = pneg %p74
    $region14: #{identity_encoder.1} parent=5 // pred_check_branch
      %77 = sbr.rel (%p75) target = $region16
    $region15: #{identity_encoder.1} parent=5 // pred_region
      // Predicated region
      $region17: #{identity_encoder.1} parent=15 // pred_check
        %p78 = pneg %p27
      $region18: #{identity_encoder.1} parent=15 // pred_check_branch
        %80 = sbr.rel (%p78) target = $region20
      $region19: #{identity_encoder.1} parent=15 // pred_region
        %p81 = scmp.lt.s32.totalorder %s7, 1
        %s82 = scalar_select %p81, %s7, 1
        %s83 = smul.addr %s82, 8
        %s84 = scalar_lea.vmem %s0, %s83
      $region20: #{identity_encoder.1} parent=15 // pred_fallthru
        _
    $region16: #{identity_encoder.1} parent=5 // pred_fallthru
      _
    %p85 = scmp.le.s32.totalorder 1, %s7
    %p86 = scmp.lt.s32.totalorder %s7, 3
    %p87 = pnand %p85, %p86
    %p88 = pneg %p87
    // Predicated region
    $region21: #{identity_encoder.1} parent=5 // pred_check
      _
    $region22: #{identity_encoder.1} parent=5 // pred_check_branch
      %90 = sbr.rel (%p87) target = $region24
    $region23: #{identity_encoder.1} parent=5 // pred_region
      %s91 = ssub.s32 %s7, 1
      %p92 = scmp.lt.s32.totalorder %s12, 1
      %s93 = scalar_select %p92, %s12, 1
      %s94 = smul.addr %s93, 8
      %s95 = scalar_lea.vmem %s0, %s94
      %p96 = pneg %p33
      %p97 = pneg %p30
      %p98 = pneg %p59
      %p99 = pneg %p56
      %p100 = scmp.lt.s32.totalorder %s12, 1
      %s101 = scalar_select %p100, %s12, 1
      %s102 = smul.addr %s101, 8
      %s103 = scalar_lea.vmem %s1, %s102
      %p104 = scmp.lt.s32.totalorder %s12, 1
      %s105 = scalar_select %p104, %s12, 1
      %s106 = smul.addr %s105, 8
      %s107 = scalar_lea.vmem %s0, %s106
      %p108 = scmp.lt.s32.totalorder %s12, 1
      %s109 = scalar_select %p108, %s12, 1
      %s110 = smul.addr %s109, 8
      %s111 = scalar_lea.vmem %s1, %s110
      %v112 = vld [vmem:[%s107] sm:$0xff]
      %113 = vst [vmem:[%s111] sm:$0xff] %v112
      %p114 = scmp.lt.s32.totalorder %s12, 1
      %s115 = scalar_select %p114, %s12, 1
      %s116 = smul.addr %s115, 8
      %s117 = scalar_lea.vmem %s1, %s116
      // Predicated region
      $region25: #{identity_encoder.1} parent=23 // pred_check
        %p118 = pneg %p56
      $region26: #{identity_encoder.1} parent=23 // pred_check_branch
        %120 = sbr.rel (%p118) target = $region28
      $region27: #{identity_encoder.1} parent=23 // pred_region
        _
      $region28: #{identity_encoder.1} parent=23 // pred_fallthru
        _
    $region24: #{identity_encoder.1} parent=5 // pred_fallthru
      _
    %p121 = scmp.le.s32.totalorder 2, %s7
    // Predicated region
    $region29: #{identity_encoder.1} parent=5 // pred_check
      %p122 = pneg %p121
    $region30: #{identity_encoder.1} parent=5 // pred_check_branch
      %124 = sbr.rel (%p122) target = $region32
    $region31: #{identity_encoder.1} parent=5 // pred_region
      %s125 = ssub.s32 %s7, 2
      // Predicated region
      $region33: #{identity_encoder.1} parent=31 // pred_check
        %p126 = pneg %p62
      $region34: #{identity_encoder.1} parent=31 // pred_check_branch
        %128 = sbr.rel (%p126) target = $region36
      $region35: #{identity_encoder.1} parent=31 // pred_region
        %p129 = scmp.lt.s32.totalorder %s13, 1
        %s130 = scalar_select %p129, %s13, 1
        %s131 = smul.addr %s130, 8
        %s132 = scalar_lea.vmem %s1, %s131
      $region36: #{identity_encoder.1} parent=31 // pred_fallthru
        _
    $region32: #{identity_encoder.1} parent=5 // pred_fallthru
      _
  $region6: #{identity_encoder.1} parent=0 // loop_footer
    %s11 = sadd.s32 1, %s7
  $region7: #{identity_encoder.1} parent=0 // loop_footer_branch
    %6 = sbr.rel target = $region3
  $region8: #{identity_encoder.1} parent=0 // loop_exit
    _

</llo_original>
